<compile_context>
chip_gen: v5e
topology: v5e:2x2
jax: 0.10.0
libtpu: 0.0.40
codegen_flags: <defaults>
</compile_context>

<pallas_src>
import jax
import jax.numpy as jnp
from jax.experimental import pallas as pl
from jax.experimental.pallas import tpu as pltpu


def _h_sigmoid_kernel(x_ref, o_ref):
    x = x_ref[...]
    # relu6(x + 3) / 6  == clamp(x + 3, 0, 6) / 6   (true divide for parity)
    y = jnp.clip(x + 3.0, 0.0, 6.0) / 6.0
    o_ref[...] = y.astype(o_ref.dtype)


def h_sigmoid(x: jax.Array, *, cols: int = 1024, max_tile_rows: int = 512) -> jax.Array:
    """Pallas TPU implementation of PyTorch h_sigmoid forward (any shape/dtype)."""
    orig_shape = x.shape
    orig_dtype = x.dtype

    n = x.size
    if n == 0:
        return x

    # Sublane alignment: 8 rows for 32-bit, 16 for 16-bit, 32 for 8-bit dtypes.
    itemsize = jnp.dtype(orig_dtype).itemsize
    sub_mult = max(8, 32 // max(itemsize, 1))

    # Rows of a lane-dense (rows, cols) slab; tile rows bounded and aligned.
    rows_needed = pl.cdiv(n, cols)
    tile_rows = min(max_tile_rows, pl.cdiv(rows_needed, sub_mult) * sub_mult)
    grid_rows = pl.cdiv(rows_needed, tile_rows)
    rows = grid_rows * tile_rows
    padded_n = rows * cols

    x_flat = x.reshape(-1)
    if padded_n != n:
        x_flat = jnp.pad(x_flat, (0, padded_n - n))
    x2d = x_flat.reshape(rows, cols)

    out2d = pl.pallas_call(
        _h_sigmoid_kernel,
        out_shape=jax.ShapeDtypeStruct((rows, cols), orig_dtype),
        grid_spec=pltpu.PrefetchScalarGridSpec(
            num_scalar_prefetch=0,
            grid=(grid_rows,),
            in_specs=[pl.BlockSpec((tile_rows, cols), lambda i: (i, 0))],
            out_specs=pl.BlockSpec((tile_rows, cols), lambda i: (i, 0)),
        ),
        compiler_params=pltpu.CompilerParams(
            dimension_semantics=("parallel",),
            vmem_limit_bytes=32 * 1024 * 1024,
        ),
    )(x2d)

    out_flat = out2d.reshape(-1)
    if padded_n != n:
        out_flat = out_flat[:n]
    return out_flat.reshape(orig_shape)


if __name__ == "__main__":
    key = jax.random.PRNGKey(0)
    # NCHW input consistent with typical conv-activation usage.
    x = jax.random.normal(key, (2, 4, 16, 16), dtype=jnp.float32) * 4.0

    y = jax.block_until_ready(h_sigmoid(x))

    # Reference check in plain JAX (same math as torch: relu6(x+3)/6).
    y_ref = jnp.clip(x + 3.0, 0.0, 6.0) / 6.0
    assert y.shape == x.shape and y.dtype == x.dtype
    assert jnp.allclose(y, y_ref, atol=1e-6), "mismatch vs reference"

    # Also sanity-check a shape that exercises padding + multi-step grid.
    x2 = jax.random.normal(jax.random.PRNGKey(1), (3, 5, 37, 23), dtype=jnp.float32) * 4.0
    y2 = jax.block_until_ready(h_sigmoid(x2))
    y2_ref = jnp.clip(x2 + 3.0, 0.0, 6.0) / 6.0
    assert jnp.allclose(y2, y2_ref, atol=1e-6), "mismatch vs reference (padded path)"

    print("KERNEL_OK")
</pallas_src>

<mosaic_0001>
module attributes {stable_mosaic.version = 11 : i64} {
  func.func @_h_sigmoid_kernel(%arg0: i32, %arg1: memref<8x1024xf32, #tpu.memory_space<vmem>>, %arg2: memref<8x1024xf32, #tpu.memory_space<vmem>>) attributes {dimension_semantics = [#tpu.dimension_semantics<parallel>], iteration_bounds = array<i64: 1>, scalar_prefetch = 0 : i64, scratch_operands = 0 : i64, tpu.core_type = #tpu.core_type<tc>, window_params = [{transform_indices = @transform_0, window_bounds = array<i64: 8, 1024>}, {transform_indices = @transform_1, window_bounds = array<i64: 8, 1024>}]} {
    %c0 = arith.constant 0 : index
    %c0_0 = arith.constant 0 : index
    %0 = vector.load %arg1[%c0, %c0_0] : memref<8x1024xf32, #tpu.memory_space<vmem>>, vector<8x1024xf32>
    %cst = arith.constant 3.000000e+00 : f32
    %1 = vector.broadcast %cst : f32 to vector<8x1024xf32>
    %2 = arith.addf %0, %1 : vector<8x1024xf32>
    %cst_1 = arith.constant 0.000000e+00 : f32
    %cst_2 = arith.constant 6.000000e+00 : f32
    %3 = vector.broadcast %cst_1 : f32 to vector<8x1024xf32>
    %4 = arith.maximumf %3, %2 : vector<8x1024xf32>
    %5 = vector.broadcast %cst_2 : f32 to vector<8x1024xf32>
    %6 = arith.minimumf %5, %4 : vector<8x1024xf32>
    %cst_3 = arith.constant 6.000000e+00 : f32
    %7 = vector.broadcast %cst_3 : f32 to vector<8x1024xf32>
    %8 = arith.divf %6, %7 : vector<8x1024xf32>
    %c0_4 = arith.constant 0 : index
    %c0_5 = arith.constant 0 : index
    %9 = vector.load %arg2[%c0_4, %c0_5] : memref<8x1024xf32, #tpu.memory_space<vmem>>, vector<8x1024xf32>
    tpu.vector_store %arg2[%c0_4, %c0_5], %8 {strides = array<i32>} : memref<8x1024xf32, #tpu.memory_space<vmem>>, vector<8x1024xf32>,
    return
  }
  func.func @transform_0(%arg0: i32) -> (i32, i32) {
    %c0_i32 = arith.constant 0 : i32
    %c0_i32_0 = arith.constant 0 : i32
    return %arg0, %c0_i32 : i32, i32
  }
  func.func @transform_1(%arg0: i32) -> (i32, i32) {
    %c0_i32 = arith.constant 0 : i32
    %c0_i32_0 = arith.constant 0 : i32
    return %arg0, %c0_i32 : i32, i32
  }
}

</mosaic_0001>

<llo_original>
// kernel: tpu_custom_call.1
$region0: #{tpu_custom_call.1}
  #allocation0 [shape = 'u32[]', space=smem, size = 0x4, offset = 0x4, fixed_abs, tag = 'smem constant byte address 0x4 - core index']
  #allocation1 [shape = 'u32[72,128]{1,0:T(1,128)}', space=vmem, size = 0x9000, scoped, tag = 'internal scratch']
  %s0 = inlined_call_operand.hbm [shape: f32[8,1024], index: 0, kind: input, shape index: {}]
  %s1 = inlined_call_operand.hbm [shape: f32[8,1024], index: 1, kind: output, shape index: {}]
  %s2 = sld [smem:[#allocation0]]
  $region18: #{tpu_custom_call.1} parent=0
    _
  %s4 = ssub.s32 1, %s2
  %s5 = scalar_select 0, %s4, %s2
  $region1: #{tpu_custom_call.1} parent=0
    #allocation2 [shape = 'u8[32768]{0}', space=vmem, size = 0x8000, scoped, tag = 'input window, operand 0, single buffered']
    #allocation3 [shape = 's32[1]{0}', space=sflag, size = 0x4, scoped, tag = 'scoped memory for tpu_custom_call.1']
    #allocation4 [shape = 's32[1]{0}', space=sflag, size = 0x4, scoped, tag = 'scoped memory for tpu_custom_call.1']
    #allocation5 [shape = 'u8[32768]{0}', space=vmem, size = 0x8000, scoped, tag = 'output window, operand 0, single buffered']
    %6 = vsyncpa [#allocation3], 0
    %7 = vsyncpa [#allocation4], 0
    // Predicated region
    $region2: #{tpu_custom_call.1} parent=1 // pred_check
      _
    $region3: #{tpu_custom_call.1} parent=1 // pred_check_branch
      %9 = sbr.rel (0) target = $region5
    $region4: #{tpu_custom_call.1} parent=1 // pred_region
      %11 = vsyncadd [#allocation3], 0
      %s13 = sshll.u32 %s0, 4
      %s14 = int_to_ptr.hbm [resolvable:$true] %s13
      %s15 = sshll.u32 [#allocation2], 4
      %s16 = int_to_ptr.vmem [resolvable:$true] %s15
      %18 = dma.hbm_to_vmem [thread:$0]  %s14, 1024, %s16, [#allocation3]
    $region5: #{tpu_custom_call.1} parent=1 // pred_fallthru
      _
    // Predicated region
    $region6: #{tpu_custom_call.1} parent=1 // pred_check
      _
    $region7: #{tpu_custom_call.1} parent=1 // pred_check_branch
      %20 = sbr.rel (0) target = $region9
    $region8: #{tpu_custom_call.1} parent=1 // pred_region
      %22 = dma.done [#allocation3], 1024
    $region9: #{tpu_custom_call.1} parent=1 // pred_fallthru
      _
    %v23 = vld [vmem:[#allocation2] sm:$0xff]
    %v24 = vld [vmem:[#allocation2 + $0x8] sm:$0xff]
    %v25 = vld [vmem:[#allocation2 + $0x10] sm:$0xff]
    %v26 = vld [vmem:[#allocation2 + $0x18] sm:$0xff]
    %v27 = vld [vmem:[#allocation2 + $0x20] sm:$0xff]
    %v28 = vld [vmem:[#allocation2 + $0x28] sm:$0xff]
    %v29 = vld [vmem:[#allocation2 + $0x30] sm:$0xff]
    %v30 = vld [vmem:[#allocation2 + $0x38] sm:$0xff]
    %v31 = vadd.f32 %v23, 3.0
    %v32 = vadd.f32 %v24, 3.0
    %v33 = vadd.f32 %v25, 3.0
    %v34 = vadd.f32 %v26, 3.0
    %v35 = vadd.f32 %v27, 3.0
    %v36 = vadd.f32 %v28, 3.0
    %v37 = vadd.f32 %v29, 3.0
    %v38 = vadd.f32 %v30, 3.0
    %v39 = vmax.f32 %v31, 0.0
    %v40 = vmax.f32 %v32, 0.0
    %v41 = vmax.f32 %v33, 0.0
    %v42 = vmax.f32 %v34, 0.0
    %v43 = vmax.f32 %v35, 0.0
    %v44 = vmax.f32 %v36, 0.0
    %v45 = vmax.f32 %v37, 0.0
    %v46 = vmax.f32 %v38, 0.0
    %v47 = vmin.f32 %v39, 6.0
    %v48 = vmin.f32 %v40, 6.0
    %v49 = vmin.f32 %v41, 6.0
    %v50 = vmin.f32 %v42, 6.0
    %v51 = vmin.f32 %v43, 6.0
    %v52 = vmin.f32 %v44, 6.0
    %v53 = vmin.f32 %v45, 6.0
    %v54 = vmin.f32 %v46, 6.0
    %v55 = vrcp.pop 6.0
    %v56 = vmul.f32 6.0, %v55
    %v57 = vsub.f32 1.0, %v56
    %v58 = vmul.f32 %v55, %v57
    %v59 = vadd.f32 %v55, %v58
    %vm60 = vweird.f32 %v55
    %v61 = vsel %vm60, %v55, %v59
    %v62 = vmul.f32 %v47, %v61
    %v63 = vmul.f32 %v48, %v61
    %v64 = vmul.f32 %v49, %v61
    %v65 = vmul.f32 %v50, %v61
    %v66 = vmul.f32 %v51, %v61
    %v67 = vmul.f32 %v52, %v61
    %v68 = vmul.f32 %v53, %v61
    %v69 = vmul.f32 %v54, %v61
    %70 = vst [vmem:[#allocation5] sm:$0xff] %v62
    %71 = vst [vmem:[#allocation5 + $0x8] sm:$0xff] %v63
    %72 = vst [vmem:[#allocation5 + $0x10] sm:$0xff] %v64
    %73 = vst [vmem:[#allocation5 + $0x18] sm:$0xff] %v65
    %74 = vst [vmem:[#allocation5 + $0x20] sm:$0xff] %v66
    %75 = vst [vmem:[#allocation5 + $0x28] sm:$0xff] %v67
    %76 = vst [vmem:[#allocation5 + $0x30] sm:$0xff] %v68
    %77 = vst [vmem:[#allocation5 + $0x38] sm:$0xff] %v69
    // Predicated region
    $region10: #{tpu_custom_call.1} parent=1 // pred_check
      _
    $region11: #{tpu_custom_call.1} parent=1 // pred_check_branch
      %79 = sbr.rel (0) target = $region13
    $region12: #{tpu_custom_call.1} parent=1 // pred_region
      %81 = vsyncadd [#allocation4], 0
      %s83 = sshll.u32 [#allocation5], 4
      %s84 = int_to_ptr.vmem [resolvable:$true] %s83
      %s85 = sshll.u32 %s1, 4
      %s86 = int_to_ptr.hbm [resolvable:$true] %s85
      %88 = dma.vmem_to_hbm [thread:$0]  %s84, 1024, %s86, [#allocation4]
    $region13: #{tpu_custom_call.1} parent=1 // pred_fallthru
      _
    // Predicated region
    $region14: #{tpu_custom_call.1} parent=1 // pred_check
      _
    $region15: #{tpu_custom_call.1} parent=1 // pred_check_branch
      %90 = sbr.rel (0) target = $region17
    $region16: #{tpu_custom_call.1} parent=1 // pred_region
      %92 = dma.done [#allocation4], 1024
    $region17: #{tpu_custom_call.1} parent=1 // pred_fallthru
      _
    %93 = vsyncpa [#allocation3], 1
    %94 = vsyncpa [#allocation4], 1

</llo_original>
